<compile_context>
chip_gen: v5e
topology: v5e:2x2
jax: 0.10.0
libtpu: 0.0.40
codegen_flags: <defaults>
</compile_context>

<pallas_src>
import jax
import jax.numpy as jnp
from jax import lax
from jax.experimental import pallas as pl
from jax.experimental.pallas import tpu as pltpu


def _round_up(a, b):
    return ((a + b - 1) // b) * b


def _pick_block_n(n, c, itemsize):
    """Largest row tile that fits a conservative VMEM budget on v5e/v6e/v7x."""
    budget = 16 * 1024 * 1024              # x + out, 2 pipeline buffers each
    per_row = 2 * 2 * c * itemsize
    bn = max(32, min(budget // max(per_row, 1), 1024))
    bn = (bn // 32) * 32                   # multiple of 32: f32/bf16/int8 packing
    bn = min(bn, _round_up(n, 32))         # don't over-pad tiny N
    # keep >= 2 grid steps when possible so a v7x megacore uses both TensorCores
    if _round_up(n, bn) == bn and n > 32:
        bn = _round_up(-(-n // 2), 32)
    return bn


def adain_kernel(x_ref, mu_ref, sigma_ref, o_ref):
    # x_ref: (TN, C), mu_ref/sigma_ref: (TN, 1), o_ref: (TN, C)
    x = x_ref[...].astype(jnp.float32)
    c = x.shape[1]

    # eq. 5: mean over channel axis (XLU cross-lane reduce)
    x_mean = jnp.sum(x, axis=1, keepdims=True) / c                 # (TN, 1)

    # eq. 6: std with the module's exact epsilon placement, as a per-row rsqrt
    diff = x - x_mean                                              # (TN, C)
    ss = jnp.sum(diff * diff, axis=1, keepdims=True)               # (TN, 1)
    inv_std = lax.rsqrt((ss + 2.3e-08) / c)                        # (TN, 1), EUP

    # eq. 8: sigma * (diff/std + mu) == diff * (sigma*inv_std) + sigma*mu
    mu_s = mu_ref[...].astype(jnp.float32)                         # (TN, 1)
    sigma_s = sigma_ref[...].astype(jnp.float32)                   # (TN, 1)
    scale = sigma_s * inv_std                                      # (TN, 1)
    shift = sigma_s * mu_s                                         # (TN, 1)
    o_ref[...] = (diff * scale + shift).astype(o_ref.dtype)


def adain(x, mu, sigma, *, block_n=None):
    """x: (N, C); mu, sigma: (N, 1).  Returns (N, C)."""
    N, C = x.shape
    if block_n is None:
        block_n = _pick_block_n(N, C, x.dtype.itemsize)
    n_pad = _round_up(N, block_n)
    if n_pad != N:
        pad = n_pad - N
        x = jnp.pad(x, ((0, pad), (0, 0)))
        mu = jnp.pad(mu, ((0, pad), (0, 0)))
        sigma = jnp.pad(sigma, ((0, pad), (0, 0)))

    grid = (n_pad // block_n,)
    out = pl.pallas_call(
        adain_kernel,
        out_shape=jax.ShapeDtypeStruct((n_pad, C), x.dtype),
        grid_spec=pltpu.PrefetchScalarGridSpec(
            num_scalar_prefetch=0,
            grid=grid,
            in_specs=[
                pl.BlockSpec((block_n, C), lambda i: (i, 0)),
                pl.BlockSpec((block_n, 1), lambda i: (i, 0)),
                pl.BlockSpec((block_n, 1), lambda i: (i, 0)),
            ],
            out_specs=pl.BlockSpec((block_n, C), lambda i: (i, 0)),
        ),
        compiler_params=pltpu.CompilerParams(
            dimension_semantics=("parallel",)),
    )(x, mu, sigma)
    return out[:N] if n_pad != N else out


def adain_ref(x, mu, sigma):
    """Pure-JAX reference mirroring the PyTorch forward exactly."""
    c = x.shape[1]
    x_mean = jnp.sum(x, axis=1) / c                                     # (N,)
    diff_t = x.T - x_mean                                               # (C, N)
    x_std = jnp.sqrt((jnp.sum((diff_t.T) ** 2, axis=1) + 2.3e-08) / c)  # (N,)
    x_norm = diff_t / x_std                                             # (C, N)
    return (jnp.squeeze(sigma, 1) * (x_norm + jnp.squeeze(mu, 1))).T    # (N, C)


if __name__ == "__main__":
    key = jax.random.PRNGKey(0)

    ok = True
    # (N, C) test cases: the module's small hidden=32 case, plus a non-divisible
    # N with lane-dense C to exercise the padding / multi-step path.
    for (N, C) in [(16, 32), (100, 256)]:
        k1, k2, k3, key = jax.random.split(key, 4)
        x = jax.random.normal(k1, (N, C), dtype=jnp.float32)
        mu_s = jax.random.normal(k2, (N, 1), dtype=jnp.float32)
        sigma_s = jax.random.uniform(k3, (N, 1), dtype=jnp.float32) + 0.5

        out = adain(x, mu_s, sigma_s)
        out = jax.block_until_ready(out)

        ref = adain_ref(x, mu_s, sigma_s)
        ok = ok and (out.shape == (N, C))
        ok = ok and bool(jnp.allclose(out, ref, atol=1e-4, rtol=1e-4))

    assert ok
    print("KERNEL_OK")
</pallas_src>

<mosaic_0001>
module attributes {stable_mosaic.version = 11 : i64} {
  func.func @adain_kernel(%arg0: i32, %arg1: memref<32x32xf32, #tpu.memory_space<vmem>>, %arg2: memref<32x1xf32, #tpu.memory_space<vmem>>, %arg3: memref<32x1xf32, #tpu.memory_space<vmem>>, %arg4: memref<32x32xf32, #tpu.memory_space<vmem>>) attributes {dimension_semantics = [#tpu.dimension_semantics<parallel>], iteration_bounds = array<i64: 1>, scalar_prefetch = 0 : i64, scratch_operands = 0 : i64, tpu.core_type = #tpu.core_type<tc>, window_params = [{transform_indices = @transform_0, window_bounds = array<i64: 32, 32>}, {transform_indices = @transform_1, window_bounds = array<i64: 32, 1>}, {transform_indices = @transform_2, window_bounds = array<i64: 32, 1>}, {transform_indices = @transform_3, window_bounds = array<i64: 32, 32>}]} {
    %c0 = arith.constant 0 : index
    %c0_0 = arith.constant 0 : index
    %0 = vector.load %arg1[%c0, %c0_0] : memref<32x32xf32, #tpu.memory_space<vmem>>, vector<32x32xf32>
    %cst = arith.constant dense<0.000000e+00> : vector<32xf32>
    %1 = vector.multi_reduction <add>, %0, %cst [1] : vector<32x32xf32> to vector<32xf32>
    %2 = vector.shape_cast %1 : vector<32xf32> to vector<32x1xf32>
    %cst_1 = arith.constant 3.200000e+01 : f32
    %3 = vector.broadcast %cst_1 : f32 to vector<32x1xf32>
    %4 = arith.divf %2, %3 : vector<32x1xf32>
    %5 = vector.broadcast %4 : vector<32x1xf32> to vector<32x32xf32>
    %6 = arith.subf %0, %5 : vector<32x32xf32>
    %7 = arith.mulf %6, %6 : vector<32x32xf32>
    %cst_2 = arith.constant dense<0.000000e+00> : vector<32xf32>
    %8 = vector.multi_reduction <add>, %7, %cst_2 [1] : vector<32x32xf32> to vector<32xf32>
    %9 = vector.shape_cast %8 : vector<32xf32> to vector<32x1xf32>
    %cst_3 = arith.constant 2.300000e-08 : f32
    %10 = vector.broadcast %cst_3 : f32 to vector<32x1xf32>
    %11 = arith.addf %9, %10 : vector<32x1xf32>
    %cst_4 = arith.constant 3.200000e+01 : f32
    %12 = vector.broadcast %cst_4 : f32 to vector<32x1xf32>
    %13 = arith.divf %11, %12 : vector<32x1xf32>
    %14 = math.rsqrt %13 : vector<32x1xf32>
    %c0_5 = arith.constant 0 : index
    %c0_6 = arith.constant 0 : index
    %15 = vector.load %arg2[%c0_5, %c0_6] : memref<32x1xf32, #tpu.memory_space<vmem>>, vector<32x1xf32>
    %c0_7 = arith.constant 0 : index
    %c0_8 = arith.constant 0 : index
    %16 = vector.load %arg3[%c0_7, %c0_8] : memref<32x1xf32, #tpu.memory_space<vmem>>, vector<32x1xf32>
    %17 = arith.mulf %16, %14 : vector<32x1xf32>
    %18 = arith.mulf %16, %15 : vector<32x1xf32>
    %19 = vector.broadcast %17 : vector<32x1xf32> to vector<32x32xf32>
    %20 = arith.mulf %6, %19 : vector<32x32xf32>
    %21 = vector.broadcast %18 : vector<32x1xf32> to vector<32x32xf32>
    %22 = arith.addf %20, %21 : vector<32x32xf32>
    %c0_9 = arith.constant 0 : index
    %c0_10 = arith.constant 0 : index
    %23 = vector.load %arg4[%c0_9, %c0_10] : memref<32x32xf32, #tpu.memory_space<vmem>>, vector<32x32xf32>
    tpu.vector_store %arg4[%c0_9, %c0_10], %22 {strides = array<i32>} : memref<32x32xf32, #tpu.memory_space<vmem>>, vector<32x32xf32>,
    return
  }
  func.func @transform_0(%arg0: i32) -> (i32, i32) {
    %c0_i32 = arith.constant 0 : i32
    %c0_i32_0 = arith.constant 0 : i32
    return %arg0, %c0_i32 : i32, i32
  }
  func.func @transform_1(%arg0: i32) -> (i32, i32) {
    %c0_i32 = arith.constant 0 : i32
    %c0_i32_0 = arith.constant 0 : i32
    return %arg0, %c0_i32 : i32, i32
  }
  func.func @transform_2(%arg0: i32) -> (i32, i32) {
    %c0_i32 = arith.constant 0 : i32
    %c0_i32_0 = arith.constant 0 : i32
    return %arg0, %c0_i32 : i32, i32
  }
  func.func @transform_3(%arg0: i32) -> (i32, i32) {
    %c0_i32 = arith.constant 0 : i32
    %c0_i32_0 = arith.constant 0 : i32
    return %arg0, %c0_i32 : i32, i32
  }
}

</mosaic_0001>

<llo_original>
// kernel: tpu_custom_call.1
$region0: #{tpu_custom_call.1}
  #allocation0 [shape = 'u32[]', space=smem, size = 0x4, offset = 0x4, fixed_abs, tag = 'smem constant byte address 0x4 - core index']
  #allocation1 [shape = 'u32[72,128]{1,0:T(1,128)}', space=vmem, size = 0x9000, scoped, tag = 'internal scratch']
  %s0 = inlined_call_operand.vmem [shape: f32[32,32], index: 0, kind: input, shape index: {}]
  %s1 = inlined_call_operand.vmem [shape: f32[32,1], index: 1, kind: input, shape index: {}]
  %s2 = inlined_call_operand.vmem [shape: f32[32,1], index: 2, kind: input, shape index: {}]
  %s3 = inlined_call_operand.hbm [shape: f32[32,32], index: 3, kind: output, shape index: {}]
  %s4 = sld [smem:[#allocation0]]
  $region22: #{tpu_custom_call.1} parent=0
    _
  %s6 = ssub.s32 1, %s4
  %s7 = scalar_select 0, %s6, %s4
  $region1: #{tpu_custom_call.1} parent=0
    #allocation2 [shape = 'u8[16384]{0}', space=vmem, size = 0x4000, scoped, tag = 'output window, operand 0, single buffered']
    #allocation3 [shape = 's32[1]{0}', space=sflag, size = 0x4, scoped, tag = 'scoped memory for tpu_custom_call.1']
    %8 = vsyncpa [#allocation3], 0
    // Predicated region
    $region2: #{tpu_custom_call.1} parent=1 // pred_check
      _
    $region3: #{tpu_custom_call.1} parent=1 // pred_check_branch
      %10 = sbr.rel (0) target = $region5
    $region4: #{tpu_custom_call.1} parent=1 // pred_region
      _
    $region5: #{tpu_custom_call.1} parent=1 // pred_fallthru
      _
    // Predicated region
    $region6: #{tpu_custom_call.1} parent=1 // pred_check
      _
    $region7: #{tpu_custom_call.1} parent=1 // pred_check_branch
      %12 = sbr.rel (0) target = $region9
    $region8: #{tpu_custom_call.1} parent=1 // pred_region
      _
    $region9: #{tpu_custom_call.1} parent=1 // pred_fallthru
      _
    // Predicated region
    $region10: #{tpu_custom_call.1} parent=1 // pred_check
      _
    $region11: #{tpu_custom_call.1} parent=1 // pred_check_branch
      %14 = sbr.rel (0) target = $region13
    $region12: #{tpu_custom_call.1} parent=1 // pred_region
      _
    $region13: #{tpu_custom_call.1} parent=1 // pred_fallthru
      _
    %v15 = vld [vmem:[%s0] sm:$0xff]
    %v16 = vld [vmem:[%s0 + $0x8] sm:$0xff]
    %v17 = vld [vmem:[%s0 + $0x10] sm:$0xff]
    %v18 = vld [vmem:[%s0 + $0x18] sm:$0xff]
    %vm19 = vcmask 261120
    %v20 = vsel %vm19, %v15, 0.0
    %21 = vadd.xlane.f32.xlu0 %v20
    %v22 = vpop.xlane.xlu0 %21
    %v23 = vsel %vm19, %v16, 0.0
    %24 = vadd.xlane.f32.xlu0 %v23
    %v25 = vpop.xlane.xlu0 %24
    %v26 = vsel %vm19, %v17, 0.0
    %27 = vadd.xlane.f32.xlu0 %v26
    %v28 = vpop.xlane.xlu0 %27
    %v29 = vsel %vm19, %v18, 0.0
    %30 = vadd.xlane.f32.xlu0 %v29
    %v31 = vpop.xlane.xlu0 %30
    %v32 = vrcp.pop 32.0
    %v33 = vmul.f32 32.0, %v32
    %v34 = vsub.f32 1.0, %v33
    %v35 = vmul.f32 %v32, %v34
    %v36 = vadd.f32 %v32, %v35
    %vm37 = vweird.f32 %v32
    %v38 = vsel %vm37, %v32, %v36
    %v39 = vmul.f32 %v22, %v38
    %v40 = vmul.f32 %v25, %v38
    %v41 = vmul.f32 %v28, %v38
    %v42 = vmul.f32 %v31, %v38
    %v43 = vsub.f32 %v15, %v39
    %v44 = vsub.f32 %v16, %v40
    %v45 = vsub.f32 %v17, %v41
    %v46 = vsub.f32 %v18, %v42
    %v47 = vmul.f32 %v43, %v43
    %v48 = vmul.f32 %v44, %v44
    %v49 = vmul.f32 %v45, %v45
    %v50 = vmul.f32 %v46, %v46
    %v51 = vsel %vm19, %v47, 0.0
    %52 = vadd.xlane.f32.xlu0 %v51
    %v53 = vpop.xlane.xlu0 %52
    %v54 = vsel %vm19, %v48, 0.0
    %55 = vadd.xlane.f32.xlu0 %v54
    %v56 = vpop.xlane.xlu0 %55
    %v57 = vsel %vm19, %v49, 0.0
    %58 = vadd.xlane.f32.xlu0 %v57
    %v59 = vpop.xlane.xlu0 %58
    %v60 = vsel %vm19, %v50, 0.0
    %61 = vadd.xlane.f32.xlu0 %v60
    %v62 = vpop.xlane.xlu0 %61
    %v63 = vadd.f32 %v53, 2.3e-08
    %v64 = vadd.f32 %v56, 2.3e-08
    %v65 = vadd.f32 %v59, 2.3e-08
    %v66 = vadd.f32 %v62, 2.3e-08
    %v67 = vmul.f32 %v63, %v38
    %v68 = vmul.f32 %v64, %v38
    %v69 = vmul.f32 %v65, %v38
    %v70 = vmul.f32 %v66, %v38
    %v71 = vrsqrt.pop %v67
    %v72 = vmul.f32 %v71, %v67
    %v73 = vmul.f32 %v72, %v71
    %v74 = vmul.f32 0.5, %v73
    %v75 = vsub.f32 1.5, %v74
    %v76 = vmul.f32 %v71, %v75
    %vm77 = vweird.f32 %v67
    %vm78 = vweird.f32 %v71
    %vm79 = vmor %vm77, %vm78
    %v80 = vsel %vm79, %v71, %v76
    %v81 = vrsqrt.pop %v68
    %v82 = vmul.f32 %v81, %v68
    %v83 = vmul.f32 %v82, %v81
    %v84 = vmul.f32 0.5, %v83
    %v85 = vsub.f32 1.5, %v84
    %v86 = vmul.f32 %v81, %v85
    %vm87 = vweird.f32 %v68
    %vm88 = vweird.f32 %v81
    %vm89 = vmor %vm87, %vm88
    %v90 = vsel %vm89, %v81, %v86
    %v91 = vrsqrt.pop %v69
    %v92 = vmul.f32 %v91, %v69
    %v93 = vmul.f32 %v92, %v91
    %v94 = vmul.f32 0.5, %v93
    %v95 = vsub.f32 1.5, %v94
    %v96 = vmul.f32 %v91, %v95
    %vm97 = vweird.f32 %v69
    %vm98 = vweird.f32 %v91
    %vm99 = vmor %vm97, %vm98
    %v100 = vsel %vm99, %v91, %v96
    %v101 = vrsqrt.pop %v70
    %v102 = vmul.f32 %v101, %v70
    %v103 = vmul.f32 %v102, %v101
    %v104 = vmul.f32 0.5, %v103
    %v105 = vsub.f32 1.5, %v104
    %v106 = vmul.f32 %v101, %v105
    %vm107 = vweird.f32 %v70
    %vm108 = vweird.f32 %v101
    %vm109 = vmor %vm107, %vm108
    %v110 = vsel %vm109, %v101, %v106
    %v111 = vld [vmem:[%s1] sm:$0xff]
    %v112 = vld [vmem:[%s1 + $0x8] sm:$0xff]
    %v113 = vld [vmem:[%s1 + $0x10] sm:$0xff]
    %v114 = vld [vmem:[%s1 + $0x18] sm:$0xff]
    %v115 = vld [vmem:[%s2] sm:$0xff]
    %v116 = vld [vmem:[%s2 + $0x8] sm:$0xff]
    %v117 = vld [vmem:[%s2 + $0x10] sm:$0xff]
    %v118 = vld [vmem:[%s2 + $0x18] sm:$0xff]
    %v119 = vmul.f32 %v115, %v80
    %v120 = vmul.f32 %v116, %v90
    %v121 = vmul.f32 %v117, %v100
    %v122 = vmul.f32 %v118, %v110
    %v123 = vmul.f32 %v115, %v111
    %v124 = vmul.f32 %v116, %v112
    %v125 = vmul.f32 %v117, %v113
    %v126 = vmul.f32 %v118, %v114
    %128 = vset.pattern.permute.xlu0 0
    %129 = vperm.xlu0 %128, %v119
    %v130 = vpop.permute.xlu0 %129
    %133 = vset.pattern.permute.xlu0 0
    %134 = vperm.xlu0 %133, %v120
    %v135 = vpop.permute.xlu0 %134
    %138 = vset.pattern.permute.xlu0 0
    %139 = vperm.xlu0 %138, %v121
    %v140 = vpop.permute.xlu0 %139
    %143 = vset.pattern.permute.xlu0 0
    %144 = vperm.xlu0 %143, %v122
    %v145 = vpop.permute.xlu0 %144
    %v147 = vmul.f32 %v43, %v130
    %v148 = vmul.f32 %v44, %v135
    %v149 = vmul.f32 %v45, %v140
    %v150 = vmul.f32 %v46, %v145
    %152 = vset.pattern.permute.xlu0 0
    %153 = vperm.xlu0 %152, %v123
    %v154 = vpop.permute.xlu0 %153
    %157 = vset.pattern.permute.xlu0 0
    %158 = vperm.xlu0 %157, %v124
    %v159 = vpop.permute.xlu0 %158
    %162 = vset.pattern.permute.xlu0 0
    %163 = vperm.xlu0 %162, %v125
    %v164 = vpop.permute.xlu0 %163
    %167 = vset.pattern.permute.xlu0 0
    %168 = vperm.xlu0 %167, %v126
    %v169 = vpop.permute.xlu0 %168
    %v171 = vadd.f32 %v147, %v154
    %v172 = vadd.f32 %v148, %v159
    %v173 = vadd.f32 %v149, %v164
    %v174 = vadd.f32 %v150, %v169
    %175 = vst.msk [vmem:[#allocation2] sm:$0xff] %vm19, %v171
    %176 = vst.msk [vmem:[#allocation2 + $0x8] sm:$0xff] %vm19, %v172
    %177 = vst.msk [vmem:[#allocation2 + $0x10] sm:$0xff] %vm19, %v173
    %178 = vst.msk [vmem:[#allocation2 + $0x18] sm:$0xff] %vm19, %v174
    // Predicated region
    $region14: #{tpu_custom_call.1} parent=1 // pred_check
      _
    $region15: #{tpu_custom_call.1} parent=1 // pred_check_branch
      %180 = sbr.rel (0) target = $region17
    $region16: #{tpu_custom_call.1} parent=1 // pred_region
      %182 = vsyncadd [#allocation3], 0
      %s183 = sshll.u32 [#allocation2], 4
      %s184 = int_to_ptr.vmem [resolvable:$true] %s183
      %s185 = sshll.u32 %s3, 4
      %s186 = int_to_ptr.hbm [resolvable:$true] %s185
      %191 = dma.vmem_to_hbm [thread:$0]  %s184, 512, %s186, [#allocation3], 128, 128, 8
    $region17: #{tpu_custom_call.1} parent=1 // pred_fallthru
      _
    // Predicated region
    $region18: #{tpu_custom_call.1} parent=1 // pred_check
      _
    $region19: #{tpu_custom_call.1} parent=1 // pred_check_branch
      %193 = sbr.rel (0) target = $region21
    $region20: #{tpu_custom_call.1} parent=1 // pred_region
      %195 = dma.done [#allocation3], 512
    $region21: #{tpu_custom_call.1} parent=1 // pred_fallthru
      _
    %196 = vsyncpa [#allocation3], 1

</llo_original>
